<compile_context>
chip_gen: v5e
topology: v5e:2x2
jax: 0.10.0
libtpu: 0.0.40
codegen_flags: <defaults>
</compile_context>

<pallas_src>
import jax
import jax.numpy as jnp
from jax.experimental import pallas as pl
from jax.experimental.pallas import tpu as pltpu


def _uncertainty_loss_kernel(x_ref, out_ref):
    # x_ref  : (2, num_task) f32 in VMEM  (row 0 = losses, row 1 = sigma)
    # out_ref: (1, 1) f32 in SMEM
    x = x_ref[...]
    loss = x[0:1, :]
    sigma = x[1:2, :]

    sigma_sq = sigma * sigma                         # pow(sigma, 2)
    per_task = 0.5 * jnp.exp(-sigma_sq) * loss + sigma_sq
    out_ref[0, 0] = jnp.sum(per_task)                # sum over tasks


def uncertainty_loss_pallas(losses, sigma):
    """losses: (num_task,) f32, sigma: (num_task,) f32 -> scalar f32."""
    num_task = sigma.shape[0]
    assert losses.shape[0] == num_task
    # TODO(synk): the zero-loss "skip" branch always trips PyTorch's assert,
    # so only the all-nonzero path is implemented (caller must ensure validity).

    # Single packed input: one HBM->VMEM DMA for the whole working set.
    x = jnp.stack(
        [losses.astype(jnp.float32), sigma.astype(jnp.float32)], axis=0
    )  # (2, num_task)

    out = pl.pallas_call(
        _uncertainty_loss_kernel,
        out_shape=jax.ShapeDtypeStruct((1, 1), jnp.float32),
        in_specs=[pl.BlockSpec(memory_space=pltpu.VMEM)],
        out_specs=pl.BlockSpec(memory_space=pltpu.SMEM),
    )(x)
    return out[0, 0]


def uncertainty_loss_ref(losses, sigma):
    """Pure-JAX reference (same math as the PyTorch forward, valid path)."""
    sigma_sq = sigma * sigma
    return jnp.sum(0.5 * jnp.exp(-sigma_sq) * losses + sigma_sq)


if __name__ == "__main__":
    num_task = 4

    key = jax.random.PRNGKey(0)
    k_sigma, k_loss = jax.random.split(key)

    # Deterministic parameter init (matches nn.Parameter(torch.randn(num_task)) shape).
    sigma = jax.random.normal(k_sigma, (num_task,), dtype=jnp.float32)
    # Synthetic per-task losses (strictly positive so the valid path is taken).
    losses = jax.random.uniform(
        k_loss, (num_task,), dtype=jnp.float32, minval=0.1, maxval=2.0
    )

    out = uncertainty_loss_pallas(losses, sigma)
    out = jax.block_until_ready(out)

    ref = uncertainty_loss_ref(losses, sigma)
    assert jnp.allclose(out, ref, rtol=1e-5, atol=1e-5), (out, ref)

    print("KERNEL_OK")
</pallas_src>

<mosaic_0001>
module attributes {stable_mosaic.version = 11 : i64} {
  func.func @_uncertainty_loss_kernel(%arg0: memref<2x4xf32, #tpu.memory_space<vmem>>, %arg1: memref<1x1xf32, #tpu.memory_space<smem>>) attributes {dimension_semantics = [], scalar_prefetch = 0 : i64, scratch_operands = 0 : i64, tpu.core_type = #tpu.core_type<tc>} {
    %c0 = arith.constant 0 : index
    %c0_0 = arith.constant 0 : index
    %0 = vector.load %arg0[%c0, %c0_0] : memref<2x4xf32, #tpu.memory_space<vmem>>, vector<2x4xf32>
    %1 = vector.extract_strided_slice %0 {offsets = [0, 0], sizes = [1, 4], strides = [1, 1]} : vector<2x4xf32> to vector<1x4xf32>
    %2 = vector.extract_strided_slice %0 {offsets = [1, 0], sizes = [1, 4], strides = [1, 1]} : vector<2x4xf32> to vector<1x4xf32>
    %3 = arith.mulf %2, %2 : vector<1x4xf32>
    %cst = arith.constant 0.000000e+00 : f32
    %4 = vector.broadcast %cst : f32 to vector<1x4xf32>
    %5 = arith.subf %4, %3 : vector<1x4xf32>
    %6 = math.exp %5 : vector<1x4xf32>
    %cst_1 = arith.constant 5.000000e-01 : f32
    %7 = vector.broadcast %cst_1 : f32 to vector<1x4xf32>
    %8 = arith.mulf %7, %6 : vector<1x4xf32>
    %9 = arith.mulf %8, %1 : vector<1x4xf32>
    %10 = arith.addf %9, %3 : vector<1x4xf32>
    %11 = vector.shape_cast %10 : vector<1x4xf32> to vector<1x1x4xf32>
    %cst_2 = arith.constant dense<0.000000e+00> : vector<1xf32>
    %12 = vector.multi_reduction <add>, %11, %cst_2 [1, 2] : vector<1x1x4xf32> to vector<1xf32>
    %13 = vector.shape_cast %12 : vector<1xf32> to vector<1x1x1xf32>
    %14 = vector.extract %13[0, 0, 0] : f32 from vector<1x1x1xf32>
    %c0_3 = arith.constant 0 : index
    %c0_4 = arith.constant 0 : index
    %15 = memref.load %arg1[%c0_3, %c0_4] : memref<1x1xf32, #tpu.memory_space<smem>>
    memref.store %14, %arg1[%c0_3, %c0_4] : memref<1x1xf32, #tpu.memory_space<smem>>
    return
  }
}

</mosaic_0001>

<llo_original>
// kernel: tpu_custom_call.1
$region0: #{tpu_custom_call.1}
  #allocation0 [shape = 'u32[]', space=smem, size = 0x4, offset = 0x4, fixed_abs, tag = 'smem constant byte address 0x4 - core index']
  #allocation1 [shape = 'u32[72,128]{1,0:T(1,128)}', space=vmem, size = 0x9000, scoped, tag = 'internal scratch']
  %s0 = inlined_call_operand.hbm [shape: f32[2,4], index: 0, kind: input, shape index: {}]
  %s1 = inlined_call_operand.hbm [shape: f32[1,1], index: 1, kind: output, shape index: {}]
  %s2 = sld [smem:[#allocation0]]
  $region18: #{tpu_custom_call.1} parent=0
    _
  %s4 = ssub.s32 1, %s2
  %s5 = scalar_select 0, %s4, %s2
  $region1: #{tpu_custom_call.1} parent=0
    #allocation2 [shape = 'u8[1024]{0}', space=vmem, size = 0x400, scoped, tag = 'input window, operand 0, single buffered']
    #allocation3 [shape = 's32[1]{0}', space=sflag, size = 0x4, scoped, tag = 'scoped memory for tpu_custom_call.1']
    #allocation4 [shape = 's32[1]{0}', space=sflag, size = 0x4, scoped, tag = 'scoped memory for tpu_custom_call.1']
    #allocation5 [shape = 'u8[512]{0}', space=smem, size = 0x200, scoped, tag = 'output window, operand 0, single buffered']
    %6 = vsyncpa [#allocation3], 0
    %7 = vsyncpa [#allocation4], 0
    // Predicated region
    $region2: #{tpu_custom_call.1} parent=1 // pred_check
      _
    $region3: #{tpu_custom_call.1} parent=1 // pred_check_branch
      %9 = sbr.rel (0) target = $region5
    $region4: #{tpu_custom_call.1} parent=1 // pred_region
      %11 = vsyncadd [#allocation3], 0
      %s13 = sshll.u32 %s0, 4
      %s14 = int_to_ptr.hbm [resolvable:$true] %s13
      %s15 = sshll.u32 [#allocation2], 4
      %s16 = int_to_ptr.vmem [resolvable:$true] %s15
      %18 = dma.hbm_to_vmem [thread:$0]  %s14, 32, %s16, [#allocation3]
    $region5: #{tpu_custom_call.1} parent=1 // pred_fallthru
      _
    // Predicated region
    $region6: #{tpu_custom_call.1} parent=1 // pred_check
      _
    $region7: #{tpu_custom_call.1} parent=1 // pred_check_branch
      %20 = sbr.rel (0) target = $region9
    $region8: #{tpu_custom_call.1} parent=1 // pred_region
      %22 = dma.done [#allocation3], 32
    $region9: #{tpu_custom_call.1} parent=1 // pred_fallthru
      _
    %v23 = vld [vmem:[#allocation2] sm:$0x3]
    %v24 = vmul.f32 %v23, %v23
    %v25 = vsub.f32 0.0, %v24
    %v26 = vmul.f32 %v25, 1.442695
    %v27 = vpow.pop %v26
    %v28 = vmul.f32 %v27, 0.5
    %v30 = vrot.slane %v23, 7
    %v32 = vmul.f32 %v28, %v30
    %v33 = vadd.f32 %v32, %v24
    %v35 = vrot.slane %v33, 1
    %vm37 = vcmask 24576
    %v38 = vsel %vm37, %v35, 0.0
    %39 = vadd.xlane.f32.xlu0 %v38
    %v40 = vpop.xlane.xlu0 %39
    %v41 = vrot.slane %v40, 4
    %v42 = vadd.f32 %v40, %v41
    %v43 = vrot.slane %v42, 2
    %v44 = vadd.f32 %v42, %v43
    %v45 = vrot.slane %v44, 1
    %v46 = vadd.f32 %v44, %v45
    %s47 = vtos %v46
    %s48 = scalar_lea.smem [#allocation5], 0
    %49 = sst [smem:[%s48]] %s47
    // Predicated region
    $region10: #{tpu_custom_call.1} parent=1 // pred_check
      _
    $region11: #{tpu_custom_call.1} parent=1 // pred_check_branch
      %51 = sbr.rel (0) target = $region13
    $region12: #{tpu_custom_call.1} parent=1 // pred_region
      %53 = vsyncadd [#allocation4], 0
      %s55 = sshll.u32 %s1, 4
      %s56 = int_to_ptr.hbm [resolvable:$true] %s55
      %58 = dma.smem_to_hbm [#allocation5], 16, %s56, [#allocation4]
    $region13: #{tpu_custom_call.1} parent=1 // pred_fallthru
      _
    // Predicated region
    $region14: #{tpu_custom_call.1} parent=1 // pred_check
      _
    $region15: #{tpu_custom_call.1} parent=1 // pred_check_branch
      %60 = sbr.rel (0) target = $region17
    $region16: #{tpu_custom_call.1} parent=1 // pred_region
      %62 = dma.done [#allocation4], 16
    $region17: #{tpu_custom_call.1} parent=1 // pred_fallthru
      _
    %63 = sfence
    %64 = vsyncpa [#allocation3], 1
    %65 = vsyncpa [#allocation4], 1

</llo_original>
